<compile_context>
chip_gen: v7x
topology: tpu7x:2x2x1
jax: 0.10.0
libtpu: 0.0.40
codegen_flags: <defaults>
</compile_context>

<pallas_src>
import jax
import jax.numpy as jnp
from jax.experimental import pallas as pl
from jax.experimental.pallas import tpu as pltpu

N_STATE = 4            # cartpole oc.n_state
N_HIDDEN = 10 * N_STATE
N_CONTROL = 1          # cartpole oc.n_control


def policy_mlp_kernel(x_ref, w1_ref, b1_ref, w2_ref, b2_ref, o_ref):
    # x_ref:  [bt, 4]   (natural [B, n_state] layout, batch on sublanes)
    # w1_ref: [40, 4]   b1_ref: [40, 1]   w2_ref: [40, 1]
    # b2_ref: [1, 1] SMEM scalar          o_ref:  [1, bt]  (batch on lanes)

    # Layer 1: h[40, bt] = W1 @ x.T. Contract both operands' minor (size-4)
    # dim so the batch->lane de-interleave of the x tile happens on-chip
    # (overlapped with the next block's DMA), not as a separate HBM transpose.
    h = jax.lax.dot_general(
        w1_ref[...], x_ref[...],
        dimension_numbers=(((1,), (1,)), ((), ())),
        preferred_element_type=jnp.float32)              # f32 in, f32 acc
    h = jnp.tanh(h + b1_ref[...])                        # lane-dense [40, bt]

    # Layer 2 on VPU + XLU: lane-broadcast w2 column multiply, then a sublane
    # reduction over the 40 hidden rows. Frees the MXU/vex slot and avoids a
    # mostly-padded 128/256-wide weight tile per grid step.
    y = jnp.sum(h * w2_ref[...], axis=0, keepdims=True)  # [1, bt]
    o_ref[...] = (y + b2_ref[0, 0]).astype(o_ref.dtype)


def _round_up(v, m):
    return ((v + m - 1) // m) * m


def policy_network_forward(x, w1, b1, w2, b2, *, block_b=8192):
    """x: [B, n_state] f32 (PyTorch layout). w1: [40, 4], b1: [40],
    w2: [1, 40], b2: [1] (nn.Linear conventions). Returns [B, n_control]."""
    x = jnp.asarray(x, jnp.float32)
    B = x.shape[0]

    w1 = jnp.asarray(w1, jnp.float32)                          # [40, 4]
    b1c = jnp.asarray(b1, jnp.float32).reshape(N_HIDDEN, 1)    # [40, 1]
    w2c = jnp.asarray(w2, jnp.float32).reshape(N_HIDDEN, 1)    # [40, 1] (== w2.T)
    b2s = jnp.asarray(b2, jnp.float32).reshape(1, 1)           # SMEM scalar

    # Batch tile: 128-aligned round-up (not next_pow_2), capped at block_b,
    # and no larger than ceil(B/2) so B > 128 always yields >= 2 grid blocks
    # (dual-TensorCore v7x can split the "parallel" batch axis).
    half = _round_up(pl.cdiv(B, 2), 128)
    bt = max(128, min(int(block_b), half))
    n_blocks = pl.cdiv(B, bt)
    # Last partial block: no explicit pad/slice — Pallas clips the writeback,
    # garbage in padded lanes never crosses lanes and never reaches HBM.

    out = pl.pallas_call(
        policy_mlp_kernel,
        out_shape=jax.ShapeDtypeStruct((N_CONTROL, B), jnp.float32),
        grid_spec=pltpu.PrefetchScalarGridSpec(
            num_scalar_prefetch=0,
            grid=(n_blocks,),
            in_specs=[
                pl.BlockSpec((bt, N_STATE), lambda i: (i, 0)),          # x tile
                pl.BlockSpec((N_HIDDEN, N_STATE), lambda i: (0, 0)),    # W1 (resident)
                pl.BlockSpec((N_HIDDEN, 1), lambda i: (0, 0)),          # b1 col (resident)
                pl.BlockSpec((N_HIDDEN, 1), lambda i: (0, 0)),          # w2 col (resident)
                pl.BlockSpec(memory_space=pltpu.MemorySpace.SMEM),      # b2 scalar
            ],
            out_specs=pl.BlockSpec((N_CONTROL, bt), lambda i: (0, i)),  # lane-dense
        ),
        compiler_params=pltpu.CompilerParams(
            dimension_semantics=("parallel",),
        ),
    )(x, w1, b1c, w2c, b2s)

    # [1, B] -> [B, 1]: order-preserving degenerate reshape (free), not a copy.
    return out.reshape(B, N_CONTROL)


def init_params(key):
    """Deterministic synthetic init (uniform, PyTorch-Linear-like bounds)."""
    k1, k2, k3, k4 = jax.random.split(key, 4)
    bound1 = 1.0 / (N_STATE ** 0.5)
    bound2 = 1.0 / (N_HIDDEN ** 0.5)
    w1 = jax.random.uniform(k1, (N_HIDDEN, N_STATE), jnp.float32, -bound1, bound1)
    b1 = jax.random.uniform(k2, (N_HIDDEN,), jnp.float32, -bound1, bound1)
    w2 = jax.random.uniform(k3, (N_CONTROL, N_HIDDEN), jnp.float32, -bound2, bound2)
    b2 = jax.random.uniform(k4, (N_CONTROL,), jnp.float32, -bound2, bound2)
    return w1, b1, w2, b2


if __name__ == "__main__":
    key = jax.random.PRNGKey(0)
    kx, kp, kx2 = jax.random.split(key, 3)

    w1, b1, w2, b2 = init_params(kp)

    def ref_forward(xv):
        hp = jax.lax.Precision.HIGHEST
        h = jnp.tanh(jnp.dot(xv, w1.T, precision=hp) + b1)
        return jnp.dot(h, w2.T, precision=hp) + b2

    # Small batch (per-timestep IRL usage): single partial 128-lane tile.
    B = 8
    x = jax.random.normal(kx, (B, N_STATE), jnp.float32)
    out = jax.block_until_ready(policy_network_forward(x, w1, b1, w2, b2))
    ref = ref_forward(x)
    assert out.shape == (B, N_CONTROL)
    # f32 throughout (no bf16 casts) -> tolerance ~4x tighter than v1's 2e-2.
    assert jnp.allclose(out, ref, atol=5e-3, rtol=5e-3), float(jnp.max(jnp.abs(out - ref)))

    # Non-tile-multiple batch: multi-block grid + implicit partial last block.
    B2 = 300
    x2 = jax.random.normal(kx2, (B2, N_STATE), jnp.float32)
    out2 = jax.block_until_ready(
        policy_network_forward(x2, w1, b1, w2, b2, block_b=256))
    ref2 = ref_forward(x2)
    assert out2.shape == (B2, N_CONTROL)
    assert jnp.allclose(out2, ref2, atol=5e-3, rtol=5e-3), float(jnp.max(jnp.abs(out2 - ref2)))

    print("KERNEL_OK")
</pallas_src>

<mosaic_0001>
module attributes {stable_mosaic.version = 11 : i64} {
  func.func @policy_mlp_kernel(%arg0: i32, %arg1: memref<128x4xf32, #tpu.memory_space<vmem>>, %arg2: memref<40x4xf32, #tpu.memory_space<vmem>>, %arg3: memref<40x1xf32, #tpu.memory_space<vmem>>, %arg4: memref<40x1xf32, #tpu.memory_space<vmem>>, %arg5: memref<1x1xf32, #tpu.memory_space<smem>>, %arg6: memref<1x128xf32, #tpu.memory_space<vmem>>) attributes {dimension_semantics = [#tpu.dimension_semantics<parallel>], iteration_bounds = array<i64: 1>, scalar_prefetch = 0 : i64, scratch_operands = 0 : i64, tpu.core_type = #tpu.core_type<tc>, window_params = [{transform_indices = @transform_0, window_bounds = array<i64: 128, 4>}, {pipeline_mode = #tpu.pipeline_mode<synchronous>, transform_indices = @transform_1, window_bounds = array<i64: 40, 4>}, {pipeline_mode = #tpu.pipeline_mode<synchronous>, transform_indices = @transform_2, window_bounds = array<i64: 40, 1>}, {pipeline_mode = #tpu.pipeline_mode<synchronous>, transform_indices = @transform_3, window_bounds = array<i64: 40, 1>}, {transform_indices = @transform_4, window_bounds = array<i64: 1, 1>}, {transform_indices = @transform_5, window_bounds = array<i64: 1, 128>}]} {
    %c0 = arith.constant 0 : index
    %c0_0 = arith.constant 0 : index
    %0 = vector.load %arg2[%c0, %c0_0] : memref<40x4xf32, #tpu.memory_space<vmem>>, vector<40x4xf32>
    %c0_1 = arith.constant 0 : index
    %c0_2 = arith.constant 0 : index
    %1 = vector.load %arg1[%c0_1, %c0_2] : memref<128x4xf32, #tpu.memory_space<vmem>>, vector<128x4xf32>
    %cst = arith.constant dense<0.000000e+00> : vector<40x128xf32>
    %2 = tpu.matmul %0, %1, %cst {dimension_numbers = #tpu.dot_dimension_numbers<[1], [1], [0], [0], [0, 0, 1, 0], [], []>} : vector<40x4xf32>, vector<128x4xf32>, vector<40x128xf32> -> vector<40x128xf32>
    %c0_3 = arith.constant 0 : index
    %c0_4 = arith.constant 0 : index
    %3 = vector.load %arg3[%c0_3, %c0_4] : memref<40x1xf32, #tpu.memory_space<vmem>>, vector<40x1xf32>
    %4 = vector.broadcast %3 : vector<40x1xf32> to vector<40x128xf32>
    %5 = arith.addf %2, %4 : vector<40x128xf32>
    %6 = math.tanh %5 : vector<40x128xf32>
    %c0_5 = arith.constant 0 : index
    %c0_6 = arith.constant 0 : index
    %7 = vector.load %arg4[%c0_5, %c0_6] : memref<40x1xf32, #tpu.memory_space<vmem>>, vector<40x1xf32>
    %8 = vector.broadcast %7 : vector<40x1xf32> to vector<40x128xf32>
    %9 = arith.mulf %6, %8 : vector<40x128xf32>
    %cst_7 = arith.constant dense<0.000000e+00> : vector<128xf32>
    %10 = vector.multi_reduction <add>, %9, %cst_7 [0] : vector<40x128xf32> to vector<128xf32>
    %11 = vector.shape_cast %10 : vector<128xf32> to vector<1x128xf32>
    %c0_8 = arith.constant 0 : index
    %c0_9 = arith.constant 0 : index
    %12 = memref.load %arg5[%c0_8, %c0_9] : memref<1x1xf32, #tpu.memory_space<smem>>
    %13 = vector.broadcast %12 : f32 to vector<1x128xf32>
    %14 = arith.addf %11, %13 : vector<1x128xf32>
    %c0_10 = arith.constant 0 : index
    %c0_11 = arith.constant 0 : index
    %15 = vector.load %arg6[%c0_10, %c0_11] : memref<1x128xf32, #tpu.memory_space<vmem>>, vector<1x128xf32>
    tpu.vector_store %arg6[%c0_10, %c0_11], %14 {strides = array<i32>} : memref<1x128xf32, #tpu.memory_space<vmem>>, vector<1x128xf32>,
    return
  }
  func.func @transform_0(%arg0: i32) -> (i32, i32) {
    %c0_i32 = arith.constant 0 : i32
    %c0_i32_0 = arith.constant 0 : i32
    return %arg0, %c0_i32 : i32, i32
  }
  func.func @transform_1(%arg0: i32) -> (i32, i32) {
    %c0_i32 = arith.constant 0 : i32
    %c0_i32_0 = arith.constant 0 : i32
    %c0_i32_1 = arith.constant 0 : i32
    return %c0_i32, %c0_i32_0 : i32, i32
  }
  func.func @transform_2(%arg0: i32) -> (i32, i32) {
    %c0_i32 = arith.constant 0 : i32
    %c0_i32_0 = arith.constant 0 : i32
    %c0_i32_1 = arith.constant 0 : i32
    return %c0_i32, %c0_i32_0 : i32, i32
  }
  func.func @transform_3(%arg0: i32) -> (i32, i32) {
    %c0_i32 = arith.constant 0 : i32
    %c0_i32_0 = arith.constant 0 : i32
    %c0_i32_1 = arith.constant 0 : i32
    return %c0_i32, %c0_i32_0 : i32, i32
  }
  func.func @transform_4(%arg0: i32) -> (i32, i32) {
    %c0_i32 = arith.constant 0 : i32
    %c0_i32_0 = arith.constant 0 : i32
    %c0_i32_1 = arith.constant 0 : i32
    return %c0_i32, %c0_i32_0 : i32, i32
  }
  func.func @transform_5(%arg0: i32) -> (i32, i32) {
    %c0_i32 = arith.constant 0 : i32
    %c0_i32_0 = arith.constant 0 : i32
    return %c0_i32, %arg0 : i32, i32
  }
}

</mosaic_0001>

<llo_original>
// kernel: tpu_custom_call.1
$region0: #{tpu_custom_call.1}
  #allocation0 [shape = 'u32[]', space=smem, size = 0x4, offset = 0x4, fixed_abs, tag = 'smem constant byte address 0x4 - core index']
  #allocation1 [shape = 'u32[144,128]{1,0:T(1,128)}', space=vmem, size = 0x12000, scoped, tag = 'internal scratch']
  #allocation2 [shape = 'f32[1,1]{1,0:T(1,128)S(6)}', space=smem, size = 0x200, scoped, tag = 'scoped memory for tpu_custom_call.1']
  %s0 = inlined_call_operand.vmem [shape: f32[8,4], index: 0, kind: input, shape index: {}]
  %s1 = inlined_call_operand.vmem [shape: f32[40,4], index: 1, kind: input, shape index: {}]
  %s2 = inlined_call_operand.vmem [shape: f32[40,1], index: 2, kind: input, shape index: {}]
  %s3 = inlined_call_operand.vmem [shape: f32[40,1], index: 3, kind: input, shape index: {}]
  %s4 = inlined_call_operand.<no memory space> [shape: f32[1,1], index: 4, kind: input, shape index: {}]
  %s5 = inlined_call_operand.hbm [shape: f32[1,8], index: 5, kind: output, shape index: {}]
  %s6 = sld [smem:[#allocation0]]
  $region30: #{tpu_custom_call.1} parent=0
    _
  %s8 = ssub.s32 1, %s6
  %s9 = scalar_select 0, %s8, %s6
  %10 = sst [smem:[#allocation2]] %s4
  $region1: #{tpu_custom_call.1} parent=0
    #allocation3 [shape = 'u8[512]{0}', space=vmem, size = 0x400, scoped, tag = 'output window, operand 0, single buffered']
    #allocation4 [shape = 's32[1]{0}', space=sflag, size = 0x4, scoped, tag = 'scoped memory for tpu_custom_call.1']
    %11 = vsyncpa [#allocation4], 0
    // Predicated region
    $region2: #{tpu_custom_call.1} parent=1 // pred_check
      _
    $region3: #{tpu_custom_call.1} parent=1 // pred_check_branch
      %13 = sbr.rel (0) target = $region5
    $region4: #{tpu_custom_call.1} parent=1 // pred_region
      _
    $region5: #{tpu_custom_call.1} parent=1 // pred_fallthru
      _
    // Predicated region
    $region6: #{tpu_custom_call.1} parent=1 // pred_check
      _
    $region7: #{tpu_custom_call.1} parent=1 // pred_check_branch
      %15 = sbr.rel (0) target = $region9
    $region8: #{tpu_custom_call.1} parent=1 // pred_region
      _
    $region9: #{tpu_custom_call.1} parent=1 // pred_fallthru
      _
    // Predicated region
    $region10: #{tpu_custom_call.1} parent=1 // pred_check
      _
    $region11: #{tpu_custom_call.1} parent=1 // pred_check_branch
      %17 = sbr.rel (0) target = $region13
    $region12: #{tpu_custom_call.1} parent=1 // pred_region
      _
    $region13: #{tpu_custom_call.1} parent=1 // pred_fallthru
      _
    // Predicated region
    $region14: #{tpu_custom_call.1} parent=1 // pred_check
      _
    $region15: #{tpu_custom_call.1} parent=1 // pred_check_branch
      %19 = sbr.rel (0) target = $region17
    $region16: #{tpu_custom_call.1} parent=1 // pred_region
      _
    $region17: #{tpu_custom_call.1} parent=1 // pred_fallthru
      _
    // Predicated region
    $region18: #{tpu_custom_call.1} parent=1 // pred_check
      _
    $region19: #{tpu_custom_call.1} parent=1 // pred_check_branch
      %21 = sbr.rel (0) target = $region21
    $region20: #{tpu_custom_call.1} parent=1 // pred_region
      _
    $region21: #{tpu_custom_call.1} parent=1 // pred_fallthru
      _
    %v22 = vld [vmem:[%s1] sm:$0xff]
    %v23 = vld [vmem:[%s1 + $0x8] sm:$0xff]
    %v24 = vld [vmem:[%s1 + $0x10] sm:$0xff]
    %v25 = vld [vmem:[%s1 + $0x18] sm:$0xff]
    %v26 = vld [vmem:[%s1 + $0x20] sm:$0xff]
    %v27 = vld [vmem:[%s0] sm:$0xff]
    %v28 = vld [vmem:[%s0 + $0x8] sm:$0xff]
    %v29 = vld [vmem:[%s0 + $0x10] sm:$0xff]
    %v30 = vld [vmem:[%s0 + $0x18] sm:$0xff]
    %v31 = vld [vmem:[%s0 + $0x20] sm:$0xff]
    %v32 = vld [vmem:[%s0 + $0x28] sm:$0xff]
    %v33 = vld [vmem:[%s0 + $0x30] sm:$0xff]
    %v34 = vld [vmem:[%s0 + $0x38] sm:$0xff]
    %v35 = vld [vmem:[%s0 + $0x40] sm:$0xff]
    %v36 = vld [vmem:[%s0 + $0x48] sm:$0xff]
    %v37 = vld [vmem:[%s0 + $0x50] sm:$0xff]
    %v38 = vld [vmem:[%s0 + $0x58] sm:$0xff]
    %v39 = vld [vmem:[%s0 + $0x60] sm:$0xff]
    %v40 = vld [vmem:[%s0 + $0x68] sm:$0xff]
    %v41 = vld [vmem:[%s0 + $0x70] sm:$0xff]
    %v42 = vld [vmem:[%s0 + $0x78] sm:$0xff]
    %v43 = vld [vmem:[%s2] sm:$0xff]
    %v44 = vld [vmem:[%s2 + $0x8] sm:$0xff]
    %v45 = vld [vmem:[%s2 + $0x10] sm:$0xff]
    %v46 = vld [vmem:[%s2 + $0x18] sm:$0xff]
    %v47 = vld [vmem:[%s2 + $0x20] sm:$0xff]
    %49 = vset.pattern.permute.xlu0 0
    %50 = vperm.xlu0 %49, %v43
    %v51 = vpop.permute.xlu0 %50
    %54 = vset.pattern.permute.xlu0 0
    %55 = vperm.xlu0 %54, %v44
    %v56 = vpop.permute.xlu0 %55
    %59 = vset.pattern.permute.xlu0 0
    %60 = vperm.xlu0 %59, %v45
    %v61 = vpop.permute.xlu0 %60
    %64 = vset.pattern.permute.xlu0 0
    %65 = vperm.xlu0 %64, %v46
    %v66 = vpop.permute.xlu0 %65
    %69 = vset.pattern.permute.xlu0 0
    %70 = vperm.xlu0 %69, %v47
    %v71 = vpop.permute.xlu0 %70
    %vm73 = vcmask 31744
    %v75 = vsel %vm73, %v22, 0
    %v78 = vsel %vm73, %v23, 0
    %v81 = vsel %vm73, %v24, 0
    %v84 = vsel %vm73, %v25, 0
    %v87 = vsel %vm73, %v26, 0
    %v90 = vsel %vm73, %v27, 0
    %v93 = vsel %vm73, %v28, 0
    %v96 = vsel %vm73, %v29, 0
    %v99 = vsel %vm73, %v30, 0
    %v102 = vsel %vm73, %v31, 0
    %v105 = vsel %vm73, %v32, 0
    %v108 = vsel %vm73, %v33, 0
    %v111 = vsel %vm73, %v34, 0
    %v114 = vsel %vm73, %v35, 0
    %v117 = vsel %vm73, %v36, 0
    %v120 = vsel %vm73, %v37, 0
    %v123 = vsel %vm73, %v38, 0
    %v126 = vsel %vm73, %v39, 0
    %v129 = vsel %vm73, %v40, 0
    %v132 = vsel %vm73, %v41, 0
    %v135 = vsel %vm73, %v42, 0
    %137 = vmatprep.subr.mxu0 0.0
    %138 = vmatpush1.xpose.msra.mxu0 %v90
    %139 = vmatprep.subr.mxu0 0.0
    %140 = vmatpush1.xpose.msra.mxu0 %v93
    %141 = vmatprep.subr.mxu0 0.0
    %142 = vmatpush1.xpose.msra.mxu0 %v96
    %143 = vmatprep.subr.mxu0 0.0
    %144 = vmatpush1.xpose.msra.mxu0 %v99
    %145 = vmatprep.subr.mxu0 0.0
    %146 = vmatpush1.xpose.msra.mxu0 %v102
    %147 = vmatprep.subr.mxu0 0.0
    %148 = vmatpush1.xpose.msra.mxu0 %v105
    %149 = vmatprep.subr.mxu0 0.0
    %150 = vmatpush1.xpose.msra.mxu0 %v108
    %151 = vmatprep.subr.mxu0 0.0
    %152 = vmatpush1.xpose.msra.mxu0 %v111
    %153 = vmatprep.subr.mxu0 0.0
    %154 = vmatpush1.xpose.msra.mxu0 %v114
    %155 = vmatprep.subr.mxu0 0.0
    %156 = vmatpush1.xpose.msra.mxu0 %v117
    %157 = vmatprep.subr.mxu0 0.0
    %158 = vmatpush1.xpose.msra.mxu0 %v120
    %159 = vmatprep.subr.mxu0 0.0
    %160 = vmatpush1.xpose.msra.mxu0 %v123
    %161 = vmatprep.subr.mxu0 0.0
    %162 = vmatpush1.xpose.msra.mxu0 %v126
    %163 = vmatprep.subr.mxu0 0.0
    %164 = vmatpush1.xpose.msra.mxu0 %v129
    %165 = vmatprep.subr.mxu0 0.0
    %166 = vmatpush1.xpose.msra.mxu0 %v132
    %167 = vmatprep.subr.mxu0 0.0
    %168 = vmatpush1.xpose.msra.mxu0 %v135
    %169 = vmatprep.subr.mxu0 0.0
    %170 = vmatpush1.xpose.msra.mxu0 0.0
    %171 = vmatprep.subr.mxu0 0.0
    %172 = vmatpush1.xpose.msra.mxu0 0.0
    %173 = vmatprep.subr.mxu0 0.0
    %174 = vmatpush1.xpose.msra.mxu0 0.0
    %175 = vmatprep.subr.mxu0 0.0
    %176 = vmatpush1.xpose.msra.mxu0 0.0
    %177 = vmatprep.subr.mxu0 0.0
    %178 = vmatpush1.xpose.msra.mxu0 0.0
    %179 = vmatprep.subr.mxu0 0.0
    %180 = vmatpush1.xpose.msra.mxu0 0.0
    %181 = vmatprep.subr.mxu0 0.0
    %182 = vmatpush1.xpose.msra.mxu0 0.0
    %183 = vmatprep.subr.mxu0 0.0
    %184 = vmatpush1.xpose.msra.mxu0 0.0
    %185 = vmatprep.subr.mxu0 0.0
    %186 = vmatpush1.xpose.msra.mxu0 0.0
    %187 = vmatprep.subr.mxu0 0.0
    %188 = vmatpush1.xpose.msra.mxu0 0.0
    %189 = vmatprep.subr.mxu0 0.0
    %190 = vmatpush1.xpose.msra.mxu0 0.0
    %191 = vmatprep.subr.mxu0 0.0
    %192 = vmatpush1.xpose.msra.mxu0 0.0
    %193 = vmatprep.subr.mxu0 0.0
    %194 = vmatpush1.xpose.msra.mxu0 0.0
    %195 = vmatprep.subr.mxu0 0.0
    %196 = vmatpush1.xpose.msra.mxu0 0.0
    %197 = vmatprep.subr.mxu0 0.0
    %198 = vmatpush1.xpose.msra.mxu0 0.0
    %199 = vmatprep.subr.mxu0 0.0
    %200 = vmatpush1.xpose.msra.mxu0 0.0
    %201 = vmatprep.mubr.f32.mxu0 0.0
    %202 = vmatmul.mubr.f32.gmra.mrb[0].mxu0 %v75
    %v203 = vpop.f32.mrb[0].mxu0
    %v204 = vadd.f32 %v51, %v203
    %v205 = vpop.f32.mrb[0].mxu0
    %206 = vmatprep.mubr.f32.mxu0 0.0
    %207 = vmatmul.mubr.f32.gmra.mrb[0].mxu0 %v78
    %v208 = vpop.f32.mrb[0].mxu0
    %v209 = vadd.f32 %v56, %v208
    %v210 = vpop.f32.mrb[0].mxu0
    %211 = vmatprep.mubr.f32.mxu0 0.0
    %212 = vmatmul.mubr.f32.gmra.mrb[0].mxu0 %v81
    %v213 = vpop.f32.mrb[0].mxu0
    %v214 = vadd.f32 %v61, %v213
    %v215 = vpop.f32.mrb[0].mxu0
    %216 = vmatprep.mubr.f32.mxu0 0.0
    %217 = vmatmul.mubr.f32.gmra.mrb[0].mxu0 %v84
    %v218 = vpop.f32.mrb[0].mxu0
    %v219 = vadd.f32 %v66, %v218
    %v220 = vpop.f32.mrb[0].mxu0
    %221 = vmatprep.mubr.f32.mxu0 0.0
    %222 = vmatmul.mubr.f32.gmra.mrb[0].mxu0 %v87
    %v223 = vpop.f32.mrb[0].mxu0
    %v224 = vadd.f32 %v71, %v223
    %v225 = vpop.f32.mrb[0].mxu0
    %226 = vdwg.mxu0
    %v227 = vtanh.pop %v204
    %v228 = vtanh.pop %v209
    %v229 = vtanh.pop %v214
    %v230 = vtanh.pop %v219
    %v231 = vtanh.pop %v224
    %v232 = vld [vmem:[%s3] sm:$0xff]
    %v233 = vld [vmem:[%s3 + $0x8] sm:$0xff]
    %v234 = vld [vmem:[%s3 + $0x10] sm:$0xff]
    %v235 = vld [vmem:[%s3 + $0x18] sm:$0xff]
    %v236 = vld [vmem:[%s3 + $0x20] sm:$0xff]
    %238 = vset.pattern.permute.xlu0 0
    %239 = vperm.xlu0 %238, %v232
    %v240 = vpop.permute.xlu0 %239
    %243 = vset.pattern.permute.xlu0 0
    %244 = vperm.xlu0 %243, %v233
    %v245 = vpop.permute.xlu0 %244
    %248 = vset.pattern.permute.xlu0 0
    %249 = vperm.xlu0 %248, %v234
    %v250 = vpop.permute.xlu0 %249
    %253 = vset.pattern.permute.xlu0 0
    %254 = vperm.xlu0 %253, %v235
    %v255 = vpop.permute.xlu0 %254
    %258 = vset.pattern.permute.xlu0 0
    %259 = vperm.xlu0 %258, %v236
    %v260 = vpop.permute.xlu0 %259
    %v262 = vmul.f32 %v227, %v240
    %v263 = vmul.f32 %v228, %v245
    %v264 = vmul.f32 %v229, %v250
    %v265 = vmul.f32 %v230, %v255
    %v266 = vmul.f32 %v231, %v260
    %v267 = vadd.f32 %v262, %v263
    %v268 = vadd.f32 %v267, %v264
    %v269 = vadd.f32 %v268, %v265
    %v270 = vadd.f32 %v269, %v266
    %v271 = vrot.slane %v270, 4
    %v272 = vadd.f32 %v270, %v271
    %v273 = vrot.slane %v272, 2
    %v274 = vadd.f32 %v272, %v273
    %v275 = vrot.slane %v274, 1
    %v276 = vadd.f32 %v274, %v275
    %s277 = sld [smem:[#allocation2]]
    %v278 = vstv %s277
    %v279 = vadd.f32 %v276, %v278
    %280 = vst [vmem:[#allocation3] sm:$0x1] %v279
    // Predicated region
    $region22: #{tpu_custom_call.1} parent=1 // pred_check
      _
    $region23: #{tpu_custom_call.1} parent=1 // pred_check_branch
      %282 = sbr.rel (0) target = $region25
    $region24: #{tpu_custom_call.1} parent=1 // pred_region
      %s284 = ssub.s32 16, 16
      %285 = vsyncadd [#allocation4], %s284
      %s287 = sshll.u32 [#allocation3], 4
      %s288 = int_to_ptr.vmem [resolvable:$true] %s287
      %290 = dma.vmem_to_hbm [thread:$0]  %s288, 16, %s5, [#allocation4]
    $region25: #{tpu_custom_call.1} parent=1 // pred_fallthru
      _
    // Predicated region
    $region26: #{tpu_custom_call.1} parent=1 // pred_check
      _
    $region27: #{tpu_custom_call.1} parent=1 // pred_check_branch
      %292 = sbr.rel (0) target = $region29
    $region28: #{tpu_custom_call.1} parent=1 // pred_region
      %293 = dma.done [#allocation4], 16
    $region29: #{tpu_custom_call.1} parent=1 // pred_fallthru
      _
    %294 = vsyncpa [#allocation4], 1

</llo_original>
